<compile_context>
chip_gen: v5e
topology: v5e:2x2
jax: 0.10.0
libtpu: 0.0.40
codegen_flags: <defaults>
</compile_context>

<pallas_src>
import functools

import jax
import jax.numpy as jnp
from jax.experimental import pallas as pl
from jax.experimental.pallas import tpu as pltpu


def _round_up(x, m):
    return ((x + m - 1) // m) * m


def _pick_tile(dim, t_max, t_min=512):
    """Largest 128-multiple tile <= t_max that minimizes zero-padding of `dim`."""
    t_max = min(t_max, _round_up(dim, 128))
    t_min = min(t_min, t_max)
    best_t, best_pad = t_max, _round_up(dim, t_max) - dim
    t = t_max - 128
    while t >= t_min:
        pad = _round_up(dim, t) - dim
        if pad < best_pad:  # strict: ties keep the larger tile
            best_t, best_pad = t, pad
        t -= 128
    return best_t


def _linear_kernel(x_ref, w_ref, b_ref, o_ref, acc_ref, *, relu):
    """One (tm, tn) output tile, reduced over the K grid axis (innermost)."""
    k = pl.program_id(2)

    @pl.when(k == 0)
    def _():
        acc_ref[...] = jnp.zeros_like(acc_ref)

    acc_ref[...] += jnp.dot(
        x_ref[...], w_ref[...], preferred_element_type=jnp.float32
    )

    @pl.when(k == pl.num_programs(2) - 1)
    def _():
        out = acc_ref[...] + b_ref[...]  # bias + ReLU fused in f32 epilogue
        if relu:
            out = jnp.maximum(out, 0.0)
        o_ref[...] = out.astype(o_ref.dtype)


def pallas_linear(x, w_t, b, *, relu, out_dtype=None, tm=256, tn=2048, tk=2048):
    """y = relu?(x @ w_t + b).  x: [M, K], w_t: [K, N] (pre-transposed), b: [N]."""
    M, K = x.shape
    K2, N = w_t.shape
    assert K == K2 and b.shape == (N,)
    out_dtype = out_dtype or x.dtype

    # Batch tile: cover the whole (8-aligned) batch so weights stream once.
    M8 = _round_up(M, 8)
    tm = M8 if M8 <= tm else tm
    M_pad = _round_up(M8, tm)
    # N/K tiles: big (amortize per-step overhead) but snapped to minimize padding.
    tn = _pick_tile(N, tn)
    tk = _pick_tile(K, tk)
    N_pad = _round_up(N, tn)
    K_pad = _round_up(K, tk)

    # Zero-pad to tile multiples (zeros contribute nothing to the dot); sliced back
    # below.  Shapes are static, so these are no-ops when already aligned.
    if M_pad != M or K_pad != K:
        x = jnp.pad(x, ((0, M_pad - M), (0, K_pad - K)))
    if K_pad != K or N_pad != N:
        w_t = jnp.pad(w_t, ((0, K_pad - K), (0, N_pad - N)))
    if N_pad != N:
        b = jnp.pad(b, (0, N_pad - N))
    b2 = b.reshape(1, N_pad).astype(jnp.float32)

    grid = (M_pad // tm, N_pad // tn, K_pad // tk)

    flops = 2 * M_pad * N_pad * K_pad
    bytes_accessed = (
        x.size * x.dtype.itemsize
        + w_t.size * w_t.dtype.itemsize
        + b2.size * 4
        + M_pad * N_pad * jnp.dtype(out_dtype).itemsize
    )

    kernel = functools.partial(_linear_kernel, relu=relu)
    out = pl.pallas_call(
        kernel,
        out_shape=jax.ShapeDtypeStruct((M_pad, N_pad), out_dtype),
        grid_spec=pltpu.PrefetchScalarGridSpec(
            num_scalar_prefetch=0,
            grid=grid,
            in_specs=[
                pl.BlockSpec((tm, tk), lambda i, j, k: (i, k)),
                pl.BlockSpec((tk, tn), lambda i, j, k: (k, j)),
                pl.BlockSpec((1, tn), lambda i, j, k: (0, j)),
            ],
            out_specs=pl.BlockSpec((tm, tn), lambda i, j, k: (i, j)),
            scratch_shapes=[pltpu.VMEM((tm, tn), jnp.float32)],
        ),
        compiler_params=pltpu.CompilerParams(
            dimension_semantics=("parallel", "parallel", "arbitrary"),
            vmem_limit_bytes=32 * 1024 * 1024,
        ),
        cost_estimate=pl.CostEstimate(
            flops=flops, transcendentals=0, bytes_accessed=bytes_accessed
        ),
    )(x, w_t, b2)

    if M_pad != M or N_pad != N:
        out = out[:M, :N]
    return out


def init_linear_params(key, in_features, out_features, dtype=jnp.float32):
    """Deterministic init matching nn.Linear shapes (weight [out, in], bias [out])."""
    kw, kb = jax.random.split(key)
    bound = 1.0 / (in_features ** 0.5)
    w = jax.random.uniform(
        kw, (out_features, in_features), dtype, minval=-bound, maxval=bound
    )
    b = jax.random.uniform(kb, (out_features,), dtype, minval=-bound, maxval=bound)
    return w, b


def prepare_params(params, weight_dtype=jnp.bfloat16):
    """One-time prep: transpose nn.Linear [out, in] -> [in, out] and cast weights
    to bf16.  Bias stays f32 (added in the f32 accumulator epilogue)."""
    return tuple(
        (w.T.astype(weight_dtype), b.astype(jnp.float32)) for w, b in params
    )


def vgg_output_block(x, prepared_params):
    (w1t, b1), (w2t, b2), (w3t, b3) = prepared_params
    h = x.astype(jnp.bfloat16)
    # VGGDense = Linear -> ReLU -> Dropout (eval mode: identity).
    # TODO(synk): train-mode stochastic dropout (pltpu PRNG) not wired in.
    h = pallas_linear(h, w1t, b1, relu=True, out_dtype=jnp.bfloat16)
    h = pallas_linear(h, w2t, b2, relu=True, out_dtype=jnp.bfloat16)
    # fc3 = plain Linear, f32 logits out.
    return pallas_linear(h, w3t, b3, relu=False, out_dtype=jnp.float32)


if __name__ == "__main__":
    # Scaled-down VGGOutputBlock dims (real: 25088 -> 4096 -> 4096 -> 1000).
    # N_CLASSES=100 intentionally exercises the non-128-multiple output path.
    B, F_IN, HIDDEN, N_CLASSES = 8, 512, 256, 100

    key = jax.random.PRNGKey(0)
    kx, k1, k2, k3 = jax.random.split(key, 4)

    x = jax.random.normal(kx, (B, F_IN), jnp.float32)
    raw_params = (
        init_linear_params(k1, F_IN, HIDDEN),
        init_linear_params(k2, HIDDEN, HIDDEN),
        init_linear_params(k3, HIDDEN, N_CLASSES),
    )
    params = prepare_params(raw_params)

    out = jax.block_until_ready(vgg_output_block(x, params))

    # Pure-JAX reference with identical bf16-weight / f32-accumulate semantics.
    (w1, b1), (w2, b2), (w3, b3) = raw_params
    h = x.astype(jnp.bfloat16)
    h = jnp.maximum(
        jnp.dot(h, w1.T.astype(jnp.bfloat16), preferred_element_type=jnp.float32)
        + b1, 0.0
    ).astype(jnp.bfloat16)
    h = jnp.maximum(
        jnp.dot(h, w2.T.astype(jnp.bfloat16), preferred_element_type=jnp.float32)
        + b2, 0.0
    ).astype(jnp.bfloat16)
    ref = (
        jnp.dot(h, w3.T.astype(jnp.bfloat16), preferred_element_type=jnp.float32)
        + b3
    )

    assert out.shape == (B, N_CLASSES)
    assert jnp.allclose(out, ref, atol=2e-2, rtol=2e-2), float(
        jnp.max(jnp.abs(out - ref))
    )

    print("KERNEL_OK")
</pallas_src>

<mosaic_0001>
module attributes {stable_mosaic.version = 11 : i64} {
  func.func @_linear_kernel(%arg0: i32, %arg1: i32, %arg2: i32, %arg3: memref<8x512xbf16, #tpu.memory_space<vmem>>, %arg4: memref<512x256xbf16, #tpu.memory_space<vmem>>, %arg5: memref<1x256xf32, #tpu.memory_space<vmem>>, %arg6: memref<8x256xbf16, #tpu.memory_space<vmem>>, %arg7: memref<8x256xf32, #tpu.memory_space<vmem>>) attributes {dimension_semantics = [#tpu.dimension_semantics<parallel>, #tpu.dimension_semantics<parallel>, #tpu.dimension_semantics<arbitrary>], iteration_bounds = array<i64: 1, 1, 1>, scalar_prefetch = 0 : i64, scratch_operands = 1 : i64, tpu.core_type = #tpu.core_type<tc>, window_params = [{transform_indices = @transform_0, window_bounds = array<i64: 8, 512>}, {transform_indices = @transform_1, window_bounds = array<i64: 512, 256>}, {transform_indices = @transform_2, window_bounds = array<i64: 1, 256>}, {transform_indices = @transform_3, window_bounds = array<i64: 8, 256>}]} {
    %c0_i32 = arith.constant 0 : i32
    %0 = arith.cmpi eq, %arg2, %c0_i32 : i32
    %1 = arith.extui %0 : i1 to i32
    %c0_i32_0 = arith.constant 0 : i32
    %2 = arith.cmpi ne, %1, %c0_i32_0 : i32
    scf.if %2 {
      %cst_10 = arith.constant 0.000000e+00 : f32
      %12 = vector.broadcast %cst_10 : f32 to vector<8x256xf32>
      %c0_11 = arith.constant 0 : index
      %c0_12 = arith.constant 0 : index
      %13 = vector.load %arg7[%c0_11, %c0_12] : memref<8x256xf32, #tpu.memory_space<vmem>>, vector<8x256xf32>
      tpu.vector_store %arg7[%c0_11, %c0_12], %12 {strides = array<i32>} : memref<8x256xf32, #tpu.memory_space<vmem>>, vector<8x256xf32>,
    } else {
    }
    %c0 = arith.constant 0 : index
    %c0_1 = arith.constant 0 : index
    %3 = vector.load %arg7[%c0, %c0_1] : memref<8x256xf32, #tpu.memory_space<vmem>>, vector<8x256xf32>
    %c0_2 = arith.constant 0 : index
    %c0_3 = arith.constant 0 : index
    %4 = vector.load %arg3[%c0_2, %c0_3] : memref<8x512xbf16, #tpu.memory_space<vmem>>, vector<8x512xbf16>
    %c0_4 = arith.constant 0 : index
    %c0_5 = arith.constant 0 : index
    %5 = vector.load %arg4[%c0_4, %c0_5] : memref<512x256xbf16, #tpu.memory_space<vmem>>, vector<512x256xbf16>
    %cst = arith.constant dense<0.000000e+00> : vector<8x256xf32>
    %6 = tpu.matmul %4, %5, %cst {dimension_numbers = #tpu.dot_dimension_numbers<[1], [0], [0], [1], [0, 0, 1, 1], [], []>} : vector<8x512xbf16>, vector<512x256xbf16>, vector<8x256xf32> -> vector<8x256xf32>
    %7 = arith.addf %3, %6 : vector<8x256xf32>
    %c0_6 = arith.constant 0 : index
    %c0_7 = arith.constant 0 : index
    %8 = vector.load %arg7[%c0_6, %c0_7] : memref<8x256xf32, #tpu.memory_space<vmem>>, vector<8x256xf32>
    tpu.vector_store %arg7[%c0_6, %c0_7], %7 {strides = array<i32>} : memref<8x256xf32, #tpu.memory_space<vmem>>, vector<8x256xf32>,
    %c0_i32_8 = arith.constant 0 : i32
    %9 = arith.cmpi eq, %arg2, %c0_i32_8 : i32
    %10 = arith.extui %9 : i1 to i32
    %c0_i32_9 = arith.constant 0 : i32
    %11 = arith.cmpi ne, %10, %c0_i32_9 : i32
    scf.if %11 {
      %c0_10 = arith.constant 0 : index
      %c0_11 = arith.constant 0 : index
      %12 = vector.load %arg7[%c0_10, %c0_11] : memref<8x256xf32, #tpu.memory_space<vmem>>, vector<8x256xf32>
      %c0_12 = arith.constant 0 : index
      %c0_13 = arith.constant 0 : index
      %13 = vector.load %arg5[%c0_12, %c0_13] : memref<1x256xf32, #tpu.memory_space<vmem>>, vector<1x256xf32>
      %14 = vector.broadcast %13 : vector<1x256xf32> to vector<8x256xf32>
      %15 = arith.addf %12, %14 : vector<8x256xf32>
      %cst_14 = arith.constant 0.000000e+00 : f32
      %16 = vector.broadcast %cst_14 : f32 to vector<8x256xf32>
      %17 = arith.maximumf %15, %16 : vector<8x256xf32>
      %18 = arith.truncf %17 : vector<8x256xf32> to vector<8x256xbf16>
      %c0_15 = arith.constant 0 : index
      %c0_16 = arith.constant 0 : index
      %19 = vector.load %arg6[%c0_15, %c0_16] : memref<8x256xbf16, #tpu.memory_space<vmem>>, vector<8x256xbf16>
      tpu.vector_store %arg6[%c0_15, %c0_16], %18 {strides = array<i32>} : memref<8x256xbf16, #tpu.memory_space<vmem>>, vector<8x256xbf16>,
    } else {
    }
    return
  }
  func.func @transform_0(%arg0: i32, %arg1: i32, %arg2: i32) -> (i32, i32) {
    %c0_i32 = arith.constant 0 : i32
    return %arg0, %arg2 : i32, i32
  }
  func.func @transform_1(%arg0: i32, %arg1: i32, %arg2: i32) -> (i32, i32) {
    %c0_i32 = arith.constant 0 : i32
    return %arg2, %arg1 : i32, i32
  }
  func.func @transform_2(%arg0: i32, %arg1: i32, %arg2: i32) -> (i32, i32) {
    %c0_i32 = arith.constant 0 : i32
    %c0_i32_0 = arith.constant 0 : i32
    return %c0_i32, %arg1 : i32, i32
  }
  func.func @transform_3(%arg0: i32, %arg1: i32, %arg2: i32) -> (i32, i32) {
    %c0_i32 = arith.constant 0 : i32
    return %arg0, %arg1 : i32, i32
  }
}

</mosaic_0001>

<llo_original>
// kernel: tpu_custom_call.1
$region0: #{tpu_custom_call.1}
  #allocation0 [shape = 'u32[]', space=smem, size = 0x4, offset = 0x4, fixed_abs, tag = 'smem constant byte address 0x4 - core index']
  #allocation1 [shape = 'u32[72,128]{1,0:T(1,128)}', space=vmem, size = 0x9000, scoped, tag = 'internal scratch']
  #allocation2 [shape = 'f32[8,256]{1,0:T(8,128)}', space=vmem, size = 0x2000, scoped, tag = 'scratch operand']
  %s0 = inlined_call_operand.hbm [shape: bf16[8,512], index: 0, kind: input, shape index: {}]
  %s1 = inlined_call_operand.hbm [shape: bf16[512,256], index: 1, kind: input, shape index: {}]
  %s2 = inlined_call_operand.hbm [shape: f32[1,256], index: 2, kind: input, shape index: {}]
  %s3 = inlined_call_operand.hbm [shape: bf16[8,256], index: 3, kind: output, shape index: {}]
  %s4 = sld [smem:[#allocation0]]
  $region42: #{tpu_custom_call.1} parent=0
    _
  %s6 = ssub.s32 1, %s4
  %s7 = scalar_select 0, %s6, %s4
  $region1: #{tpu_custom_call.1} parent=0
    #allocation3 [shape = 'u8[8192]{0}', space=vmem, size = 0x2000, scoped, tag = 'input window, operand 0, single buffered']
    #allocation4 [shape = 's32[1]{0}', space=sflag, size = 0x4, scoped, tag = 'scoped memory for tpu_custom_call.1']
    #allocation5 [shape = 's32[1]{0}', space=sflag, size = 0x4, scoped, tag = 'scoped memory for tpu_custom_call.1']
    #allocation6 [shape = 'u8[262144]{0}', space=vmem, size = 0x40000, scoped, tag = 'input window, operand 1, single buffered']
    #allocation7 [shape = 's32[1]{0}', space=sflag, size = 0x4, scoped, tag = 'scoped memory for tpu_custom_call.1']
    #allocation8 [shape = 'u8[1024]{0}', space=vmem, size = 0x400, scoped, tag = 'input window, operand 2, single buffered']
    #allocation9 [shape = 'u8[4096]{0}', space=vmem, size = 0x1000, scoped, tag = 'output window, operand 0, single buffered']
    %8 = vsyncpa [#allocation4], 0
    %9 = vsyncpa [#allocation7], 0
    %10 = vsyncpa [#allocation5], 0
    // Predicated region
    $region2: #{tpu_custom_call.1} parent=1 // pred_check
      _
    $region3: #{tpu_custom_call.1} parent=1 // pred_check_branch
      %12 = sbr.rel (0) target = $region5
    $region4: #{tpu_custom_call.1} parent=1 // pred_region
      %14 = vsyncadd [#allocation4], 0
      %s16 = sshll.u32 %s0, 4
      %s17 = int_to_ptr.hbm [resolvable:$true] %s16
      %s18 = sshll.u32 [#allocation3], 4
      %s19 = int_to_ptr.vmem [resolvable:$true] %s18
      %21 = dma.hbm_to_vmem [thread:$0]  %s17, 256, %s19, [#allocation4]
    $region5: #{tpu_custom_call.1} parent=1 // pred_fallthru
      _
    // Predicated region
    $region6: #{tpu_custom_call.1} parent=1 // pred_check
      _
    $region7: #{tpu_custom_call.1} parent=1 // pred_check_branch
      %23 = sbr.rel (0) target = $region9
    $region8: #{tpu_custom_call.1} parent=1 // pred_region
      %25 = vsyncadd [#allocation7], 0
      %s26 = sshll.u32 %s1, 4
      %s27 = int_to_ptr.hbm [resolvable:$true] %s26
      %s28 = sshll.u32 [#allocation6], 4
      %s29 = int_to_ptr.vmem [resolvable:$true] %s28
      %34 = dma.hbm_to_vmem [thread:$0]  %s27, 8192, %s29, [#allocation7], 128, 128, 8
    $region9: #{tpu_custom_call.1} parent=1 // pred_fallthru
      _
    // Predicated region
    $region10: #{tpu_custom_call.1} parent=1 // pred_check
      _
    $region11: #{tpu_custom_call.1} parent=1 // pred_check_branch
      %36 = sbr.rel (0) target = $region13
    $region12: #{tpu_custom_call.1} parent=1 // pred_region
      %38 = vsyncadd [#allocation7], 0
      %s40 = sshll.u32 %s2, 4
      %s41 = int_to_ptr.hbm [resolvable:$true] %s40
      %s42 = sshll.u32 [#allocation8], 4
      %s43 = int_to_ptr.vmem [resolvable:$true] %s42
      %45 = dma.hbm_to_vmem [thread:$0]  %s41, 32, %s43, [#allocation7]
    $region13: #{tpu_custom_call.1} parent=1 // pred_fallthru
      _
    // Predicated region
    $region14: #{tpu_custom_call.1} parent=1 // pred_check
      _
    $region15: #{tpu_custom_call.1} parent=1 // pred_check_branch
      %47 = sbr.rel (0) target = $region17
    $region16: #{tpu_custom_call.1} parent=1 // pred_region
      %49 = dma.done [#allocation4], 256
    $region17: #{tpu_custom_call.1} parent=1 // pred_fallthru
      _
    // Predicated region
    $region18: #{tpu_custom_call.1} parent=1 // pred_check
      _
    $region19: #{tpu_custom_call.1} parent=1 // pred_check_branch
      %51 = sbr.rel (0) target = $region21
    $region20: #{tpu_custom_call.1} parent=1 // pred_region
      %53 = dma.done [#allocation7], 8192
    $region21: #{tpu_custom_call.1} parent=1 // pred_fallthru
      _
    // Predicated region
    $region22: #{tpu_custom_call.1} parent=1 // pred_check
      _
    $region23: #{tpu_custom_call.1} parent=1 // pred_check_branch
      %55 = sbr.rel (0) target = $region25
    $region24: #{tpu_custom_call.1} parent=1 // pred_region
      %57 = dma.done [#allocation7], 32
    $region25: #{tpu_custom_call.1} parent=1 // pred_fallthru
      _
    %p58 = scmp.eq.s32.totalorder 0, 0
    // Predicated region
    $region26: #{tpu_custom_call.1} parent=1 // pred_check
      %p59 = pneg %p58
    $region27: #{tpu_custom_call.1} parent=1 // pred_check_branch
      %61 = sbr.rel (%p59) target = $region29
    $region28: #{tpu_custom_call.1} parent=1 // pred_region
      %62 = vst [vmem:[#allocation2] sm:$0xff] 0.0
      %63 = vst [vmem:[#allocation2 + $0x8] sm:$0xff] 0.0
    $region29: #{tpu_custom_call.1} parent=1 // pred_fallthru
      _
    %v64 = vld [vmem:[#allocation2] sm:$0xff]
    %v65 = vld [vmem:[#allocation2 + $0x8] sm:$0xff]
    %v66 = vld [vmem:[#allocation3] sm:$0xff]
    %v67 = vld [vmem:[#allocation3 + $0x8] sm:$0xff]
    %v68 = vld [vmem:[#allocation6] sm:$0xff]
    %v69 = vld [vmem:[#allocation6 + $0x8] sm:$0xff]
    %v70 = vld [vmem:[#allocation6 + $0x10] sm:$0xff]
    %v71 = vld [vmem:[#allocation6 + $0x18] sm:$0xff]
    %v72 = vld [vmem:[#allocation6 + $0x20] sm:$0xff]
    %v73 = vld [vmem:[#allocation6 + $0x28] sm:$0xff]
    %v74 = vld [vmem:[#allocation6 + $0x30] sm:$0xff]
    %v75 = vld [vmem:[#allocation6 + $0x38] sm:$0xff]
    %v76 = vld [vmem:[#allocation6 + $0x40] sm:$0xff]
    %v77 = vld [vmem:[#allocation6 + $0x48] sm:$0xff]
    %v78 = vld [vmem:[#allocation6 + $0x50] sm:$0xff]
    %v79 = vld [vmem:[#allocation6 + $0x58] sm:$0xff]
    %v80 = vld [vmem:[#allocation6 + $0x60] sm:$0xff]
    %v81 = vld [vmem:[#allocation6 + $0x68] sm:$0xff]
    %v82 = vld [vmem:[#allocation6 + $0x70] sm:$0xff]
    %v83 = vld [vmem:[#allocation6 + $0x78] sm:$0xff]
    %v84 = vld [vmem:[#allocation6 + $0x80] sm:$0xff]
    %v85 = vld [vmem:[#allocation6 + $0x88] sm:$0xff]
    %v86 = vld [vmem:[#allocation6 + $0x90] sm:$0xff]
    %v87 = vld [vmem:[#allocation6 + $0x98] sm:$0xff]
    %v88 = vld [vmem:[#allocation6 + $0xa0] sm:$0xff]
    %v89 = vld [vmem:[#allocation6 + $0xa8] sm:$0xff]
    %v90 = vld [vmem:[#allocation6 + $0xb0] sm:$0xff]
    %v91 = vld [vmem:[#allocation6 + $0xb8] sm:$0xff]
    %v92 = vld [vmem:[#allocation6 + $0xc0] sm:$0xff]
    %v93 = vld [vmem:[#allocation6 + $0xc8] sm:$0xff]
    %v94 = vld [vmem:[#allocation6 + $0xd0] sm:$0xff]
    %v95 = vld [vmem:[#allocation6 + $0xd8] sm:$0xff]
    %v96 = vld [vmem:[#allocation6 + $0xe0] sm:$0xff]
    %v97 = vld [vmem:[#allocation6 + $0xe8] sm:$0xff]
    %v98 = vld [vmem:[#allocation6 + $0xf0] sm:$0xff]
    %v99 = vld [vmem:[#allocation6 + $0xf8] sm:$0xff]
    %v100 = vld [vmem:[#allocation6 + $0x100] sm:$0xff]
    %v101 = vld [vmem:[#allocation6 + $0x108] sm:$0xff]
    %v102 = vld [vmem:[#allocation6 + $0x110] sm:$0xff]
    %v103 = vld [vmem:[#allocation6 + $0x118] sm:$0xff]
    %v104 = vld [vmem:[#allocation6 + $0x120] sm:$0xff]
    %v105 = vld [vmem:[#allocation6 + $0x128] sm:$0xff]
    %v106 = vld [vmem:[#allocation6 + $0x130] sm:$0xff]
    %v107 = vld [vmem:[#allocation6 + $0x138] sm:$0xff]
    %v108 = vld [vmem:[#allocation6 + $0x140] sm:$0xff]
    %v109 = vld [vmem:[#allocation6 + $0x148] sm:$0xff]
    %v110 = vld [vmem:[#allocation6 + $0x150] sm:$0xff]
    %v111 = vld [vmem:[#allocation6 + $0x158] sm:$0xff]
    %v112 = vld [vmem:[#allocation6 + $0x160] sm:$0xff]
    %v113 = vld [vmem:[#allocation6 + $0x168] sm:$0xff]
    %v114 = vld [vmem:[#allocation6 + $0x170] sm:$0xff]
    %v115 = vld [vmem:[#allocation6 + $0x178] sm:$0xff]
    %v116 = vld [vmem:[#allocation6 + $0x180] sm:$0xff]
    %v117 = vld [vmem:[#allocation6 + $0x188] sm:$0xff]
    %v118 = vld [vmem:[#allocation6 + $0x190] sm:$0xff]
    %v119 = vld [vmem:[#allocation6 + $0x198] sm:$0xff]
    %v120 = vld [vmem:[#allocation6 + $0x1a0] sm:$0xff]
    %v121 = vld [vmem:[#allocation6 + $0x1a8] sm:$0xff]
    %v122 = vld [vmem:[#allocation6 + $0x1b0] sm:$0xff]
    %v123 = vld [vmem:[#allocation6 + $0x1b8] sm:$0xff]
    %v124 = vld [vmem:[#allocation6 + $0x1c0] sm:$0xff]
    %v125 = vld [vmem:[#allocation6 + $0x1c8] sm:$0xff]
    %v126 = vld [vmem:[#allocation6 + $0x1d0] sm:$0xff]
    %v127 = vld [vmem:[#allocation6 + $0x1d8] sm:$0xff]
    %v128 = vld [vmem:[#allocation6 + $0x1e0] sm:$0xff]
    %v129 = vld [vmem:[#allocation6 + $0x1e8] sm:$0xff]
    %v130 = vld [vmem:[#allocation6 + $0x1f0] sm:$0xff]
    %v131 = vld [vmem:[#allocation6 + $0x1f8] sm:$0xff]
    %v134 = vunpack.c.l.b16 %v66
    %v135 = vunpack.c.h.b16 %v66
    %v136 = vunpack.c.l.b16 %v67
    %v137 = vunpack.c.h.b16 %v67
    %v138 = vpack.c.b16 %v134, %v134
    %v139 = vpack.c.b16 %v135, %v135
    %v140 = vpack.c.b16 %v136, %v136
    %v141 = vpack.c.b16 %v137, %v137
    %v210 = vunpack.c.l.b16 %v68
    %v211 = vunpack.c.h.b16 %v68
    %v212 = vunpack.c.l.b16 %v69
    %v213 = vunpack.c.h.b16 %v69
    %v214 = vunpack.c.l.b16 %v70
    %v215 = vunpack.c.h.b16 %v70
    %v216 = vunpack.c.l.b16 %v71
    %v217 = vunpack.c.h.b16 %v71
    %v218 = vunpack.c.l.b16 %v72
    %v219 = vunpack.c.h.b16 %v72
    %v220 = vunpack.c.l.b16 %v73
    %v221 = vunpack.c.h.b16 %v73
    %v222 = vunpack.c.l.b16 %v74
    %v223 = vunpack.c.h.b16 %v74
    %v224 = vunpack.c.l.b16 %v75
    %v225 = vunpack.c.h.b16 %v75
    %v226 = vunpack.c.l.b16 %v76
    %v227 = vunpack.c.h.b16 %v76
    %v228 = vunpack.c.l.b16 %v77
    %v229 = vunpack.c.h.b16 %v77
    %v230 = vunpack.c.l.b16 %v78
    %v231 = vunpack.c.h.b16 %v78
    %v232 = vunpack.c.l.b16 %v79
    %v233 = vunpack.c.h.b16 %v79
    %v234 = vunpack.c.l.b16 %v80
    %v235 = vunpack.c.h.b16 %v80
    %v236 = vunpack.c.l.b16 %v81
    %v237 = vunpack.c.h.b16 %v81
    %v238 = vunpack.c.l.b16 %v82
    %v239 = vunpack.c.h.b16 %v82
    %v240 = vunpack.c.l.b16 %v83
    %v241 = vunpack.c.h.b16 %v83
    %v242 = vunpack.c.l.b16 %v84
    %v243 = vunpack.c.h.b16 %v84
    %v244 = vunpack.c.l.b16 %v85
    %v245 = vunpack.c.h.b16 %v85
    %v246 = vunpack.c.l.b16 %v86
    %v247 = vunpack.c.h.b16 %v86
    %v248 = vunpack.c.l.b16 %v87
    %v249 = vunpack.c.h.b16 %v87
    %v250 = vunpack.c.l.b16 %v88
    %v251 = vunpack.c.h.b16 %v88
    %v252 = vunpack.c.l.b16 %v89
    %v253 = vunpack.c.h.b16 %v89
    %v254 = vunpack.c.l.b16 %v90
    %v255 = vunpack.c.h.b16 %v90
    %v256 = vunpack.c.l.b16 %v91
    %v257 = vunpack.c.h.b16 %v91
    %v258 = vunpack.c.l.b16 %v92
    %v259 = vunpack.c.h.b16 %v92
    %v260 = vunpack.c.l.b16 %v93
    %v261 = vunpack.c.h.b16 %v93
    %v262 = vunpack.c.l.b16 %v94
    %v263 = vunpack.c.h.b16 %v94
    %v264 = vunpack.c.l.b16 %v95
    %v265 = vunpack.c.h.b16 %v95
    %v266 = vunpack.c.l.b16 %v96
    %v267 = vunpack.c.h.b16 %v96
    %v268 = vunpack.c.l.b16 %v97
    %v269 = vunpack.c.h.b16 %v97
    %v270 = vunpack.c.l.b16 %v98
    %v271 = vunpack.c.h.b16 %v98
    %v272 = vunpack.c.l.b16 %v99
    %v273 = vunpack.c.h.b16 %v99
    %v274 = vunpack.c.l.b16 %v100
    %v275 = vunpack.c.h.b16 %v100
    %v276 = vunpack.c.l.b16 %v101
    %v277 = vunpack.c.h.b16 %v101
    %v278 = vunpack.c.l.b16 %v102
    %v279 = vunpack.c.h.b16 %v102
    %v280 = vunpack.c.l.b16 %v103
    %v281 = vunpack.c.h.b16 %v103
    %v282 = vunpack.c.l.b16 %v104
    %v283 = vunpack.c.h.b16 %v104
    %v284 = vunpack.c.l.b16 %v105
    %v285 = vunpack.c.h.b16 %v105
    %v286 = vunpack.c.l.b16 %v106
    %v287 = vunpack.c.h.b16 %v106
    %v288 = vunpack.c.l.b16 %v107
    %v289 = vunpack.c.h.b16 %v107
    %v290 = vunpack.c.l.b16 %v108
    %v291 = vunpack.c.h.b16 %v108
    %v292 = vunpack.c.l.b16 %v109
    %v293 = vunpack.c.h.b16 %v109
    %v294 = vunpack.c.l.b16 %v110
    %v295 = vunpack.c.h.b16 %v110
    %v296 = vunpack.c.l.b16 %v111
    %v297 = vunpack.c.h.b16 %v111
    %v298 = vunpack.c.l.b16 %v112
    %v299 = vunpack.c.h.b16 %v112
    %v300 = vunpack.c.l.b16 %v113
    %v301 = vunpack.c.h.b16 %v113
    %v302 = vunpack.c.l.b16 %v114
    %v303 = vunpack.c.h.b16 %v114
    %v304 = vunpack.c.l.b16 %v115
    %v305 = vunpack.c.h.b16 %v115
    %v306 = vunpack.c.l.b16 %v116
    %v307 = vunpack.c.h.b16 %v116
    %v308 = vunpack.c.l.b16 %v117
    %v309 = vunpack.c.h.b16 %v117
    %v310 = vunpack.c.l.b16 %v118
    %v311 = vunpack.c.h.b16 %v118
    %v312 = vunpack.c.l.b16 %v119
    %v313 = vunpack.c.h.b16 %v119
    %v314 = vunpack.c.l.b16 %v120
    %v315 = vunpack.c.h.b16 %v120
    %v316 = vunpack.c.l.b16 %v121
    %v317 = vunpack.c.h.b16 %v121
    %v318 = vunpack.c.l.b16 %v122
    %v319 = vunpack.c.h.b16 %v122
    %v320 = vunpack.c.l.b16 %v123
    %v321 = vunpack.c.h.b16 %v123
    %v322 = vunpack.c.l.b16 %v124
    %v323 = vunpack.c.h.b16 %v124
    %v324 = vunpack.c.l.b16 %v125
    %v325 = vunpack.c.h.b16 %v125
    %v326 = vunpack.c.l.b16 %v126
    %v327 = vunpack.c.h.b16 %v126
    %v328 = vunpack.c.l.b16 %v127
    %v329 = vunpack.c.h.b16 %v127
    %v330 = vunpack.c.l.b16 %v128
    %v331 = vunpack.c.h.b16 %v128
    %v332 = vunpack.c.l.b16 %v129
    %v333 = vunpack.c.h.b16 %v129
    %v334 = vunpack.c.l.b16 %v130
    %v335 = vunpack.c.h.b16 %v130
    %v336 = vunpack.c.l.b16 %v131
    %v337 = vunpack.c.h.b16 %v131
    %v338 = vpack.c.b16 %v212, %v210
    %v339 = vpack.c.b16 %v213, %v211
    %v340 = vpack.c.b16 %v216, %v214
    %v341 = vpack.c.b16 %v217, %v215
    %v342 = vpack.c.b16 %v220, %v218
    %v343 = vpack.c.b16 %v221, %v219
    %v344 = vpack.c.b16 %v224, %v222
    %v345 = vpack.c.b16 %v225, %v223
    %v346 = vpack.c.b16 %v228, %v226
    %v347 = vpack.c.b16 %v229, %v227
    %v348 = vpack.c.b16 %v232, %v230
    %v349 = vpack.c.b16 %v233, %v231
    %v350 = vpack.c.b16 %v236, %v234
    %v351 = vpack.c.b16 %v237, %v235
    %v352 = vpack.c.b16 %v240, %v238
    %v353 = vpack.c.b16 %v241, %v239
    %v354 = vpack.c.b16 %v244, %v242
    %v355 = vpack.c.b16 %v245, %v243
    %v356 = vpack.c.b16 %v248, %v246
    %v357 = vpack.c.b16 %v249, %v247
    %v358 = vpack.c.b16 %v252, %v250
    %v359 = vpack.c.b16 %v253, %v251
    %v360 = vpack.c.b16 %v256, %v254
    %v361 = vpack.c.b16 %v257, %v255
    %v362 = vpack.c.b16 %v260, %v258
    %v363 = vpack.c.b16 %v261, %v259
    %v364 = vpack.c.b16 %v264, %v262
    %v365 = vpack.c.b16 %v265, %v263
    %v366 = vpack.c.b16 %v268, %v266
    %v367 = vpack.c.b16 %v269, %v267
    %v368 = vpack.c.b16 %v272, %v270
    %v369 = vpack.c.b16 %v273, %v271
    %v370 = vpack.c.b16 %v276, %v274
    %v371 = vpack.c.b16 %v277, %v275
    %v372 = vpack.c.b16 %v280, %v278
    %v373 = vpack.c.b16 %v281, %v279
    %v374 = vpack.c.b16 %v284, %v282
    %v375 = vpack.c.b16 %v285, %v283
    %v376 = vpack.c.b16 %v288, %v286
    %v377 = vpack.c.b16 %v289, %v287
    %v378 = vpack.c.b16 %v292, %v290
    %v379 = vpack.c.b16 %v293, %v291
    %v380 = vpack.c.b16 %v296, %v294
    %v381 = vpack.c.b16 %v297, %v295
    %v382 = vpack.c.b16 %v300, %v298
    %v383 = vpack.c.b16 %v301, %v299
    %v384 = vpack.c.b16 %v304, %v302
    %v385 = vpack.c.b16 %v305, %v303
    %v386 = vpack.c.b16 %v308, %v306
    %v387 = vpack.c.b16 %v309, %v307
    %v388 = vpack.c.b16 %v312, %v310
    %v389 = vpack.c.b16 %v313, %v311
    %v390 = vpack.c.b16 %v316, %v314
    %v391 = vpack.c.b16 %v317, %v315
    %v392 = vpack.c.b16 %v320, %v318
    %v393 = vpack.c.b16 %v321, %v319
    %v394 = vpack.c.b16 %v324, %v322
    %v395 = vpack.c.b16 %v325, %v323
    %v396 = vpack.c.b16 %v328, %v326
    %v397 = vpack.c.b16 %v329, %v327
    %v398 = vpack.c.b16 %v332, %v330
    %v399 = vpack.c.b16 %v333, %v331
    %v400 = vpack.c.b16 %v336, %v334
    %v401 = vpack.c.b16 %v337, %v335
    %466 = vmatpush.bf16.msra.mxu0 %v352
    %467 = vmatpush.bf16.msra.mxu0 %v350
    %468 = vmatpush.bf16.msra.mxu0 %v348
    %469 = vmatpush.bf16.msra.mxu0 %v346
    %470 = vmatpush.bf16.msra.mxu0 %v344
    %471 = vmatpush.bf16.msra.mxu0 %v342
    %472 = vmatpush.bf16.msra.mxu0 %v340
    %473 = vmatpush.bf16.msra.mxu0 %v338
    %474 = vmatmul.bf16.gmra.mxu0 %v138
    %v475 = vpop.f32.mrf.mxu0
    %v476 = vadd.f32 0.0, %v475
    %v477 = vpop.f32.mrf.mxu0
    %478 = vdwg.mxu0
    %479 = vmatpush.bf16.msra.mxu0 %v368
    %480 = vmatpush.bf16.msra.mxu0 %v366
    %481 = vmatpush.bf16.msra.mxu0 %v364
    %482 = vmatpush.bf16.msra.mxu0 %v362
    %483 = vmatpush.bf16.msra.mxu0 %v360
    %484 = vmatpush.bf16.msra.mxu0 %v358
    %485 = vmatpush.bf16.msra.mxu0 %v356
    %486 = vmatpush.bf16.msra.mxu0 %v354
    %487 = vmatmul.bf16.gmra.mxu0 %v139
    %v488 = vpop.f32.mrf.mxu0
    %v489 = vadd.f32 %v476, %v488
    %v490 = vpop.f32.mrf.mxu0
    %491 = vdwg.mxu0
    %492 = vmatpush.bf16.msra.mxu0 %v384
    %493 = vmatpush.bf16.msra.mxu0 %v382
    %494 = vmatpush.bf16.msra.mxu0 %v380
    %495 = vmatpush.bf16.msra.mxu0 %v378
    %496 = vmatpush.bf16.msra.mxu0 %v376
    %497 = vmatpush.bf16.msra.mxu0 %v374
    %498 = vmatpush.bf16.msra.mxu0 %v372
    %499 = vmatpush.bf16.msra.mxu0 %v370
    %500 = vmatmul.bf16.gmra.mxu0 %v140
    %v501 = vpop.f32.mrf.mxu0
    %v502 = vadd.f32 %v489, %v501
    %v503 = vpop.f32.mrf.mxu0
    %504 = vdwg.mxu0
    %505 = vmatpush.bf16.msra.mxu0 %v400
    %506 = vmatpush.bf16.msra.mxu0 %v398
    %507 = vmatpush.bf16.msra.mxu0 %v396
    %508 = vmatpush.bf16.msra.mxu0 %v394
    %509 = vmatpush.bf16.msra.mxu0 %v392
    %510 = vmatpush.bf16.msra.mxu0 %v390
    %511 = vmatpush.bf16.msra.mxu0 %v388
    %512 = vmatpush.bf16.msra.mxu0 %v386
    %513 = vmatmul.bf16.gmra.mxu0 %v141
    %v514 = vpop.f32.mrf.mxu0
    %v515 = vadd.f32 %v502, %v514
    %v516 = vpop.f32.mrf.mxu0
    %517 = vdwg.mxu0
    %518 = vmatpush.bf16.msra.mxu0 %v353
    %519 = vmatpush.bf16.msra.mxu0 %v351
    %520 = vmatpush.bf16.msra.mxu0 %v349
    %521 = vmatpush.bf16.msra.mxu0 %v347
    %522 = vmatpush.bf16.msra.mxu0 %v345
    %523 = vmatpush.bf16.msra.mxu0 %v343
    %524 = vmatpush.bf16.msra.mxu0 %v341
    %525 = vmatpush.bf16.msra.mxu0 %v339
    %526 = vmatmul.bf16.gmra.mxu0 %v138
    %v527 = vpop.f32.mrf.mxu0
    %v528 = vadd.f32 0.0, %v527
    %v529 = vpop.f32.mrf.mxu0
    %530 = vdwg.mxu0
    %531 = vmatpush.bf16.msra.mxu0 %v369
    %532 = vmatpush.bf16.msra.mxu0 %v367
    %533 = vmatpush.bf16.msra.mxu0 %v365
    %534 = vmatpush.bf16.msra.mxu0 %v363
    %535 = vmatpush.bf16.msra.mxu0 %v361
    %536 = vmatpush.bf16.msra.mxu0 %v359
    %537 = vmatpush.bf16.msra.mxu0 %v357
    %538 = vmatpush.bf16.msra.mxu0 %v355
    %539 = vmatmul.bf16.gmra.mxu0 %v139
    %v540 = vpop.f32.mrf.mxu0
    %v541 = vadd.f32 %v528, %v540
    %v542 = vpop.f32.mrf.mxu0
    %543 = vdwg.mxu0
    %544 = vmatpush.bf16.msra.mxu0 %v385
    %545 = vmatpush.bf16.msra.mxu0 %v383
    %546 = vmatpush.bf16.msra.mxu0 %v381
    %547 = vmatpush.bf16.msra.mxu0 %v379
    %548 = vmatpush.bf16.msra.mxu0 %v377
    %549 = vmatpush.bf16.msra.mxu0 %v375
    %550 = vmatpush.bf16.msra.mxu0 %v373
    %551 = vmatpush.bf16.msra.mxu0 %v371
    %552 = vmatmul.bf16.gmra.mxu0 %v140
    %v553 = vpop.f32.mrf.mxu0
    %v554 = vadd.f32 %v541, %v553
    %v555 = vpop.f32.mrf.mxu0
    %556 = vdwg.mxu0
    %557 = vmatpush.bf16.msra.mxu0 %v401
    %558 = vmatpush.bf16.msra.mxu0 %v399
    %559 = vmatpush.bf16.msra.mxu0 %v397
    %560 = vmatpush.bf16.msra.mxu0 %v395
    %561 = vmatpush.bf16.msra.mxu0 %v393
    %562 = vmatpush.bf16.msra.mxu0 %v391
    %563 = vmatpush.bf16.msra.mxu0 %v389
    %564 = vmatpush.bf16.msra.mxu0 %v387
    %565 = vmatmul.bf16.gmra.mxu0 %v141
    %v566 = vpop.f32.mrf.mxu0
    %v567 = vadd.f32 %v554, %v566
    %v568 = vpop.f32.mrf.mxu0
    %569 = vdwg.mxu0
    %v570 = vadd.f32 %v64, %v515
    %v571 = vadd.f32 %v65, %v567
    %572 = vst [vmem:[#allocation2] sm:$0xff] %v570
    %573 = vst [vmem:[#allocation2 + $0x8] sm:$0xff] %v571
    // Predicated region
    $region30: #{tpu_custom_call.1} parent=1 // pred_check
      %p574 = pneg %p58
    $region31: #{tpu_custom_call.1} parent=1 // pred_check_branch
      %576 = sbr.rel (%p574) target = $region33
    $region32: #{tpu_custom_call.1} parent=1 // pred_region
      %v577 = vld [vmem:[#allocation2] sm:$0xff]
      %v578 = vld [vmem:[#allocation2 + $0x8] sm:$0xff]
      %v579 = vld [vmem:[#allocation8] sm:$0x3]
      %v581 = vperm.slane %v579, 0
      %v582 = vperm.slane %v579, 1
      %v585 = vadd.f32 %v577, %v581
      %v586 = vadd.f32 %v578, %v582
      %v587 = vmax.f32 %v585, 0.0
      %v588 = vmax.f32 %v586, 0.0
      %v589 = vpack.c.bf16 %v588, %v587
      %590 = vst [vmem:[#allocation9] sm:$0xff] %v589
    $region33: #{tpu_custom_call.1} parent=1 // pred_fallthru
      _
    // Predicated region
    $region34: #{tpu_custom_call.1} parent=1 // pred_check
      _
    $region35: #{tpu_custom_call.1} parent=1 // pred_check_branch
      %592 = sbr.rel (0) target = $region37
    $region36: #{tpu_custom_call.1} parent=1 // pred_region
      %594 = vsyncadd [#allocation5], 0
      %s596 = sshll.u32 [#allocation9], 4
      %s597 = int_to_ptr.vmem [resolvable:$true] %s596
      %s598 = sshll.u32 %s3, 4
      %s599 = int_to_ptr.hbm [resolvable:$true] %s598
      %601 = dma.vmem_to_hbm [thread:$0]  %s597, 128, %s599, [#allocation5]
    $region37: #{tpu_custom_call.1} parent=1 // pred_fallthru
      _
    // Predicated region
    $region38: #{tpu_custom_call.1} parent=1 // pred_check
      _
    $region39: #{tpu_custom_call.1} parent=1 // pred_check_branch
      %603 = sbr.rel (0) target = $region41
    $region40: #{tpu_custom_call.1} parent=1 // pred_region
      %605 = dma.done [#allocation5], 128
    $region41: #{tpu_custom_call.1} parent=1 // pred_fallthru
      _
    %606 = vsyncpa [#allocation4], 1
    %607 = vsyncpa [#allocation7], 1
    %608 = vsyncpa [#allocation5], 1

</llo_original>
